<compile_context>
chip_gen: v7x
topology: tpu7x:2x2x1
jax: 0.10.0
libtpu: 0.0.40
codegen_flags: <defaults>
</compile_context>

<pallas_src>
import functools

import jax
import jax.numpy as jnp
from jax import lax
from jax.experimental import pallas as pl
from jax.experimental.pallas import tpu as pltpu

_LANE = 128
_MIB = 1024 * 1024


def _round_up(x, m):
    return (x + m - 1) // m * m


def _vmem_capacity_bytes(default=64 * _MIB):
    # v5e/v6e: 128 MiB physical VMEM, v7x: 64 MiB per TensorCore.  Fall back to
    # the smallest (v7x) if the query is unavailable.
    try:
        return int(pltpu.get_tpu_info().vmem_capacity_bytes)
    except Exception:
        return default


def _gp_sumsq_kernel(g_ref, acc_ref, *, tb, tr, ch, num_k, tail_rows):
    """Accumulate per-sample, per-(sublane,lane) sum-of-squares of one tile.

    g_ref:   (tb, tr, 128) gradient tile in its native dtype.
    acc_ref: (tb, 8, 128) f32 slab, VMEM-resident across the k (reduction) grid
             axis; the single cross-lane/sublane reduce happens in the wrapper.
    """
    k = pl.program_id(1)

    @pl.when(k == 0)
    def _():
        acc_ref[...] = jnp.zeros_like(acc_ref)

    def accumulate(valid_rows):
        # valid_rows: None => all tr rows valid; otherwise a static row count
        # (only the last, overhanging grid step pays the mask).
        full = tr // ch
        rem = tr % ch

        if full > 0:
            if valid_rows is not None:
                row_iota = lax.broadcasted_iota(jnp.int32, (tb, ch, _LANE), 1)

            def body(c, acc):
                off = pl.multiple_of(c * ch, ch)
                g = g_ref[:, pl.ds(off, ch), :].astype(jnp.float32)
                if valid_rows is not None:
                    g = jnp.where(off + row_iota < valid_rows, g, 0.0)
                gsq = g * g
                # (tb, ch, 128) -> (tb, ch//8, 8, 128): vreg-preserving reshape;
                # the axis-1 sum is pure VPU adds (no cross-lane work).
                return acc + jnp.sum(gsq.reshape(tb, ch // 8, 8, _LANE), axis=1)

            acc = lax.fori_loop(0, full, body, acc_ref[...],
                                unroll=2 if full > 1 else 1)
            acc_ref[...] = acc

        if rem > 0:
            # Static tail of the single-tile (num_k == 1) case only; the row
            # count may not be a multiple of 8, so fold it into sublane row 0.
            g = g_ref[:, pl.ds(full * ch, rem), :].astype(jnp.float32)
            part = jnp.sum(g * g, axis=1, keepdims=True)        # (tb, 1, 128)
            acc_ref[:, 0:1, :] += part

    if num_k == 1 or tail_rows == 0:
        accumulate(None)
    else:
        # Pay the boundary mask only on the final (overhanging) grid step.
        @pl.when(k < num_k - 1)
        def _():
            accumulate(None)

        @pl.when(k == num_k - 1)
        def _():
            accumulate(tail_rows)


def gradient_penalty_from_grad(grad_interp, *, per_buffer_bytes=16 * _MIB,
                               chunk_rows=256):
    """grad_interp: (B, ...) gradient tensor -> scalar WGAN-GP penalty."""
    B = grad_interp.shape[0]
    g2d = grad_interp.reshape(B, -1)   # native dtype: bf16 grads stream at half the bytes
    D = g2d.shape[1]
    itemsize = jnp.dtype(g2d.dtype).itemsize

    # Lane-dense, per-sample layout (B, R, 128).
    # TODO(synk): when D % 128 != 0 the jnp.pad below costs one extra copy of
    # the gradient; a column-masked 2-D fallback path would avoid it.
    D_pad = _round_up(max(D, 1), _LANE)
    if D_pad != D:
        g2d = jnp.pad(g2d, ((0, 0), (0, D_pad - D)))
    R = D_pad // _LANE
    g3 = g2d.reshape(B, R, _LANE)

    # --- Tile sizing: multi-MiB input buffers (double-buffered), budgets on
    # actual (sublane-padded) VMEM bytes, generation-aware ceiling.
    cap = _vmem_capacity_bytes()
    usable = max(24 * _MIB, int(cap * 0.7))
    per_buf = min(int(per_buffer_bytes), max(2 * _MIB, (usable - 8 * _MIB) // 2))
    rows_budget = max(8, per_buf // (_LANE * itemsize))

    if R > rows_budget:
        # Large per-sample gradient: one sample per tile, big row blocks.
        tb = 1
        ch = max(8, (min(chunk_rows, 131072 // (_LANE * itemsize)) // 8) * 8)
        tr = max(ch, rows_budget // ch * ch)
        num_k = pl.cdiv(R, tr)
        tail_rows = R % tr
    else:
        # Whole sample fits in one tile: pack several samples per grid step so
        # transfers stay large for big batches.  tb must divide B; cap at 8
        # (vreg pressure) and keep >= 2 blocks on the parallel axis (v7x).
        rows_eff = _round_up(R, 8)
        fit = max(1, rows_budget // rows_eff)
        tb_cap = min(8, fit, B if B == 1 else max(1, B // 2))
        tb = 1
        for d in range(tb_cap, 0, -1):
            if B % d == 0:
                tb = d
                break
        ch = max(8, (min(chunk_rows, 131072 // (tb * _LANE * itemsize)) // 8) * 8)
        tr = R
        num_k = 1
        tail_rows = 0

    if tail_rows:
        assert tr % ch == 0  # masked path assumes whole chunks

    tile_bytes = tb * _round_up(tr, 8) * _LANE * itemsize   # real (padded) bytes
    acc_bytes = tb * 8 * _LANE * 4
    vmem_limit = int(max(8 * _MIB, 2 * tile_bytes + 4 * acc_bytes + 4 * _MIB))

    kernel = functools.partial(_gp_sumsq_kernel, tb=tb, tr=tr, ch=ch,
                               num_k=num_k, tail_rows=tail_rows)

    # Output BlockSpec is constant along k -> the (tb, 8, 128) slab stays
    # VMEM-resident across the whole reduction (it IS the accumulator) and is
    # flushed to HBM once per sample-block.
    acc = pl.pallas_call(
        kernel,
        out_shape=jax.ShapeDtypeStruct((B, 8, _LANE), jnp.float32),
        grid_spec=pl.GridSpec(
            grid=(B // tb, num_k),
            in_specs=[pl.BlockSpec((tb, tr, _LANE), lambda b, k: (b, k, 0))],
            out_specs=pl.BlockSpec((tb, 8, _LANE), lambda b, k: (b, 0, 0)),
        ),
        compiler_params=pltpu.CompilerParams(
            # samples: independent -> "parallel" (2 TCs on v7x); k: reduction.
            dimension_semantics=("parallel", "arbitrary"),
            vmem_limit_bytes=vmem_limit,
        ),
    )(g3)

    # Tiny finalize on (B, 8, 128): one reduce + sqrt + mean.
    sumsq = jnp.sum(acc, axis=(1, 2))                        # (B,)
    # Safe sqrt: forward value exact; avoids inf/NaN derivative at 0 when the
    # penalty is differentiated again (create_graph=True analogue).
    nonzero = sumsq > 0.0
    norm = jnp.where(nonzero, jnp.sqrt(jnp.where(nonzero, sumsq, 1.0)), 0.0)
    return jnp.mean((norm - 1.0) ** 2)


def gradient_penalty_loss(critic_fn, interp):
    # Equivalent of:
    #   torch.autograd.grad(outputs=interp_crit, inputs=interp,
    #                       grad_outputs=ones_like(interp_crit),
    #                       create_graph=True, retain_graph=True,
    #                       only_inputs=True)[0]
    # Higher-order grad tracking is handled transparently by JAX tracing if
    # this function is itself differentiated.
    interp_crit, vjp_fn = jax.vjp(critic_fn, interp)
    grad_outputs = jnp.ones_like(interp_crit)
    (grad_interp,) = vjp_fn(grad_outputs)
    return gradient_penalty_from_grad(grad_interp)


if __name__ == "__main__":
    key = jax.random.PRNGKey(0)
    k_x, k_w, k_g, k_h, k_i, k_j = jax.random.split(key, 6)

    # --- Full GradientPenaltyLoss path: autograd (jax.vjp) + Pallas reduction.
    B, C, H, W = 2, 4, 16, 16
    D = C * H * W
    interp = jax.random.normal(k_x, (B, C, H, W), dtype=jnp.float32)
    w_crit = jax.random.normal(k_w, (D, 1), dtype=jnp.float32) * 0.02

    def critic_fn(x):
        return x.reshape(x.shape[0], -1) @ w_crit            # (B, 1)

    loss = gradient_penalty_loss(critic_fn, interp)
    jax.block_until_ready(loss)

    crit, vjp_fn = jax.vjp(critic_fn, interp)
    (g_ref,) = vjp_fn(jnp.ones_like(crit))
    ref = jnp.mean((jnp.linalg.norm(g_ref.reshape(B, -1), axis=1) - 1.0) ** 2)
    assert jnp.allclose(loss, ref, rtol=1e-5, atol=1e-5), (loss, ref)

    def np_ref(g):
        g2 = g.reshape(g.shape[0], -1).astype(jnp.float32)
        return jnp.mean((jnp.linalg.norm(g2, axis=1) - 1.0) ** 2)

    # --- Multi-tile reduction with an overhanging (masked) last tile, f32.
    g_b = jax.random.normal(k_g, (2, 3, 40, 64), dtype=jnp.float32)   # D=7680, R=60
    out_b = gradient_penalty_from_grad(g_b, per_buffer_bytes=8192, chunk_rows=8)
    jax.block_until_ready(out_b)
    assert jnp.allclose(out_b, np_ref(g_b), rtol=1e-5, atol=1e-5), (out_b, np_ref(g_b))

    # --- Same shapes, streamed as bf16 (half the HBM bytes), f32 accumulate.
    g_c = g_b.astype(jnp.bfloat16)
    out_c = gradient_penalty_from_grad(g_c, per_buffer_bytes=8192, chunk_rows=8)
    jax.block_until_ready(out_c)
    assert jnp.allclose(out_c, np_ref(g_c), rtol=1e-3, atol=1e-3), (out_c, np_ref(g_c))

    # --- D not a multiple of 128 (padded path) + non-multiple-of-8 row tail.
    g_d = jax.random.normal(k_h, (2, 3, 24, 24), dtype=jnp.float32)   # D=1728
    out_d = gradient_penalty_from_grad(g_d)
    jax.block_until_ready(out_d)
    assert jnp.allclose(out_d, np_ref(g_d), rtol=1e-5, atol=1e-5), (out_d, np_ref(g_d))

    # --- Multiple samples packed per tile (tb > 1), tail-only path.
    g_e = jax.random.normal(k_i, (8, 1, 16, 16), dtype=jnp.float32)   # D=256, R=2
    out_e = gradient_penalty_from_grad(g_e)
    jax.block_until_ready(out_e)
    assert jnp.allclose(out_e, np_ref(g_e), rtol=1e-5, atol=1e-5), (out_e, np_ref(g_e))

    # --- Multiple samples packed per tile (tb > 1), chunked fori path.
    g_f = jax.random.normal(k_j, (4, 5, 32, 64), dtype=jnp.float32)   # D=10240, R=80
    out_f = gradient_penalty_from_grad(g_f, chunk_rows=16)
    jax.block_until_ready(out_f)
    assert jnp.allclose(out_f, np_ref(g_f), rtol=1e-5, atol=1e-5), (out_f, np_ref(g_f))

    print("KERNEL_OK")
</pallas_src>

<mosaic_0001>
module attributes {stable_mosaic.version = 11 : i64} {
  func.func @_gp_sumsq_kernel(%arg0: i32, %arg1: i32, %arg2: memref<1x8x128xf32, #tpu.memory_space<vmem>>, %arg3: memref<1x8x128xf32, #tpu.memory_space<vmem>>) attributes {dimension_semantics = [#tpu.dimension_semantics<parallel>, #tpu.dimension_semantics<arbitrary>], iteration_bounds = array<i64: 2, 1>, scalar_prefetch = 0 : i64, scratch_operands = 0 : i64, tpu.core_type = #tpu.core_type<tc>, window_params = [{transform_indices = @transform_0, window_bounds = array<i64: 1, 8, 128>}, {transform_indices = @transform_1, window_bounds = array<i64: 1, 8, 128>}]} {
    %c0_i32 = arith.constant 0 : i32
    %0 = arith.cmpi eq, %arg1, %c0_i32 : i32
    %1 = arith.extui %0 : i1 to i32
    %c0_i32_0 = arith.constant 0 : i32
    %2 = arith.cmpi ne, %1, %c0_i32_0 : i32
    scf.if %2 {
      %cst_9 = arith.constant 0.000000e+00 : f32
      %10 = vector.broadcast %cst_9 : f32 to vector<1x8x128xf32>
      %c0_10 = arith.constant 0 : index
      %c0_11 = arith.constant 0 : index
      %c0_12 = arith.constant 0 : index
      %11 = vector.load %arg3[%c0_10, %c0_11, %c0_12] : memref<1x8x128xf32, #tpu.memory_space<vmem>>, vector<1x8x128xf32>
      tpu.vector_store %arg3[%c0_10, %c0_11, %c0_12], %10 {strides = array<i32>} : memref<1x8x128xf32, #tpu.memory_space<vmem>>, vector<1x8x128xf32>,
    } else {
    }
    %c0 = arith.constant 0 : index
    %c0_1 = arith.constant 0 : index
    %c0_2 = arith.constant 0 : index
    %3 = vector.load %arg2[%c0, %c0_1, %c0_2] : memref<1x8x128xf32, #tpu.memory_space<vmem>>, vector<1x8x128xf32>
    %4 = arith.mulf %3, %3 : vector<1x8x128xf32>
    %cst = arith.constant dense<0.000000e+00> : vector<1x128xf32>
    %5 = vector.multi_reduction <add>, %4, %cst [1] : vector<1x8x128xf32> to vector<1x128xf32>
    %6 = vector.shape_cast %5 : vector<1x128xf32> to vector<1x1x128xf32>
    %c0_3 = arith.constant 0 : index
    %c0_4 = arith.constant 0 : index
    %c0_5 = arith.constant 0 : index
    %7 = vector.load %arg3[%c0_3, %c0_4, %c0_5] : memref<1x8x128xf32, #tpu.memory_space<vmem>>, vector<1x1x128xf32>
    %8 = arith.addf %7, %6 : vector<1x1x128xf32>
    %c0_6 = arith.constant 0 : index
    %c0_7 = arith.constant 0 : index
    %c0_8 = arith.constant 0 : index
    %9 = vector.load %arg3[%c0_6, %c0_7, %c0_8] : memref<1x8x128xf32, #tpu.memory_space<vmem>>, vector<1x1x128xf32>
    tpu.vector_store %arg3[%c0_6, %c0_7, %c0_8], %8 {strides = array<i32>} : memref<1x8x128xf32, #tpu.memory_space<vmem>>, vector<1x1x128xf32>,
    return
  }
  func.func @transform_0(%arg0: i32, %arg1: i32) -> (i32, i32, i32) {
    %c0_i32 = arith.constant 0 : i32
    %c0_i32_0 = arith.constant 0 : i32
    return %arg0, %arg1, %c0_i32 : i32, i32, i32
  }
  func.func @transform_1(%arg0: i32, %arg1: i32) -> (i32, i32, i32) {
    %c0_i32 = arith.constant 0 : i32
    %c0_i32_0 = arith.constant 0 : i32
    %c0_i32_1 = arith.constant 0 : i32
    return %arg0, %c0_i32, %c0_i32_0 : i32, i32, i32
  }
}

</mosaic_0001>

<llo_original>
// kernel: tpu_custom_call.1
$region0: #{tpu_custom_call.1}
  #allocation0 [shape = 'u32[]', space=smem, size = 0x4, offset = 0x4, fixed_abs, tag = 'smem constant byte address 0x4 - core index']
  #allocation1 [shape = 'u32[144,128]{1,0:T(1,128)}', space=vmem, size = 0x12000, scoped, tag = 'internal scratch']
  %s0 = inlined_call_operand.hbm [shape: f32[2,8,128], index: 0, kind: input, shape index: {}]
  %s1 = inlined_call_operand.hbm [shape: f32[2,8,128], index: 1, kind: output, shape index: {}]
  %s2 = sld [smem:[#allocation0]]
  $region45: #{tpu_custom_call.1} parent=0
    _
  %s4 = ssub.s32 1, %s2
  %s5 = scalar_select 0, %s4, %s2
  $region1: #{tpu_custom_call.1} parent=0
    #allocation2 [shape = 'u8[8192]{0}', space=vmem, size = 0x2000, scoped, tag = 'input window, operand 0']
    #allocation3 [shape = 's32[2]{0}', space=sflag, size = 0x8, scoped, tag = 'scoped memory for tpu_custom_call.1']
    #allocation4 [shape = 's32[2]{0}', space=sflag, size = 0x8, scoped, tag = 'scoped memory for tpu_custom_call.1']
    #allocation5 [shape = 'u8[8192]{0}', space=vmem, size = 0x2000, scoped, tag = 'output window, operand 0']
    %6 = vsyncpa [#allocation3], 0
    %s7 = scalar_lea.sflag [#allocation3], 1
    %8 = vsyncpa %s7, 0
    %9 = vsyncpa [#allocation4], 0
    %s10 = scalar_lea.sflag [#allocation4], 1
    %11 = vsyncpa %s10, 0
    loop: start=0, step=1, limit=4
    $region2: #{tpu_custom_call.1} parent=1 // loop_pre_header
      _
    $region3: #{tpu_custom_call.1} parent=1 // loop_header
      %s13 = sphi 0, %s17
      %p14 = scmp.ge.s32.totalorder %s13, 4
      %s20 = sphi 0, %s32
      %s21 = sphi 0, %s28
      %s22 = sphi 0, %s20
      %s23 = sphi 0, %s21
      %s24 = sphi 0, %s22
      %s25 = sphi 0, %s23
      %s37 = sphi 0, %s39
      %s40 = sphi 0, %s37
      %s41 = sphi 0, %s40
      %s57 = sphi 0, %s41
      %s63 = sphi 0, %s65
      %s66 = sphi 0, %s63
      %s67 = sphi 0, %s66
      %s83 = sphi 0, %s67
    $region4: #{tpu_custom_call.1} parent=1 // loop_header_branch
      %16 = sbr.rel (%p14) target = $region8
    $region5: #{tpu_custom_call.1} parent=1 // loop_body
      %s18 = ssub.s32 %s13, 1
      %s19 = ssub.s32 %s13, 2
      %s26 = sadd.s32 1, %s21
      %p27 = scmp.ge.s32.totalorder %s26, 1
      %s28 = scalar_select %p27, 0, %s26
      %s29 = sadd.s32 1, %s20
      %s30 = scalar_select %p27, %s29, %s20
      %p31 = scmp.ge.s32.totalorder %s30, 2
      %s32 = scalar_select %p31, 0, %s30
      %s33 = ssub.s32 %s20, %s32
      %s34 = ssub.s32 %s21, %s28
      %s35 = sor.u32 %s33, %s34
      %p36 = scmp.eq.s32.totalorder %s35, 0
      %s38 = sadd.s32 %s37, 1
      %s39 = scalar_select %p36, %s37, %s38
      %p42 = pneg %p36
      %p43 = scmp.eq.s32.totalorder %s13, 1
      %p44 = por %p42, %p43
      %p45 = scmp.ne.s32.totalorder %s37, %s40
      %p46 = scmp.eq.s32.totalorder %s13, 0
      %p47 = por %p45, %p46
      %p48 = scmp.ne.s32.totalorder %s37, %s40
      %p49 = scmp.eq.s32.totalorder %s18, 1
      %p50 = por %p48, %p49
      %p51 = scmp.ne.s32.totalorder %s40, %s41
      %p52 = scmp.eq.s32.totalorder %s18, 0
      %p53 = por %p51, %p52
      %p54 = scmp.ne.s32.totalorder %s40, %s41
      %p55 = scmp.eq.s32.totalorder %s19, 1
      %p56 = por %p54, %p55
      %p58 = scmp.ne.s32.totalorder %s41, %s57
      %p59 = scmp.eq.s32.totalorder %s19, 0
      %p60 = por %p58, %p59
      %s61 = ssub.s32 %s20, %s32
      %p62 = scmp.eq.s32.totalorder %s61, 0
      %s64 = sadd.s32 %s63, 1
      %s65 = scalar_select %p62, %s63, %s64
      %p68 = pneg %p62
      %p69 = scmp.eq.s32.totalorder %s13, 1
      %p70 = por %p68, %p69
      %p71 = scmp.ne.s32.totalorder %s63, %s66
      %p72 = scmp.eq.s32.totalorder %s13, 0
      %p73 = por %p71, %p72
      %p74 = scmp.ne.s32.totalorder %s63, %s66
      %p75 = scmp.eq.s32.totalorder %s18, 1
      %p76 = por %p74, %p75
      %p77 = scmp.ne.s32.totalorder %s66, %s67
      %p78 = scmp.eq.s32.totalorder %s18, 0
      %p79 = por %p77, %p78
      %p80 = scmp.ne.s32.totalorder %s66, %s67
      %p81 = scmp.eq.s32.totalorder %s19, 1
      %p82 = por %p80, %p81
      %p84 = scmp.ne.s32.totalorder %s67, %s83
      %p85 = scmp.eq.s32.totalorder %s19, 0
      %p86 = por %p84, %p85
      %p87 = scmp.le.s32.totalorder 1, %s13
      %p88 = scmp.lt.s32.totalorder %s13, 3
      %p89 = pnand %p87, %p88
      %p90 = pneg %p89
      // Predicated region
      $region9: #{tpu_custom_call.1} parent=5 // pred_check
        _
      $region10: #{tpu_custom_call.1} parent=5 // pred_check_branch
        %92 = sbr.rel (%p89) target = $region12
      $region11: #{tpu_custom_call.1} parent=5 // pred_region
        %s93 = ssub.s32 %s13, 1
      $region12: #{tpu_custom_call.1} parent=5 // pred_fallthru
        _
      %p94 = scmp.lt.s32.totalorder %s13, 2
      // Predicated region
      $region13: #{tpu_custom_call.1} parent=5 // pred_check
        %p95 = pneg %p94
      $region14: #{tpu_custom_call.1} parent=5 // pred_check_branch
        %97 = sbr.rel (%p95) target = $region16
      $region15: #{tpu_custom_call.1} parent=5 // pred_region
        // Predicated region
        $region17: #{tpu_custom_call.1} parent=15 // pred_check
          %p98 = pneg %p47
        $region18: #{tpu_custom_call.1} parent=15 // pred_check_branch
          %100 = sbr.rel (%p98) target = $region20
        $region19: #{tpu_custom_call.1} parent=15 // pred_region
          %s101 = sand.u32 %s37, 1
          %s102 = scalar_lea.sflag [#allocation3], %s101
          %s103 = sand.u32 %s37, 1
          %s104 = smul.addr %s103, 8
          %s105 = scalar_lea.vmem [#allocation2], %s104
          %s107 = ssub.s32 128, 128
          %108 = vsyncadd %s102, %s107
          %s109 = sadd.s32 %s21, %s20
          %s110 = smul.addr %s109, 128
          %s111 = scalar_lea.hbm %s0, %s110
          %s113 = sshll.u32 %s105, 4
          %s114 = int_to_ptr.vmem [resolvable:$true] %s113
          %116 = dma.hbm_to_vmem [thread:$0]  %s111, 128, %s114, %s102
        $region20: #{tpu_custom_call.1} parent=15 // pred_fallthru
          _
      $region16: #{tpu_custom_call.1} parent=5 // pred_fallthru
        _
      %p117 = scmp.le.s32.totalorder 1, %s13
      %p118 = scmp.lt.s32.totalorder %s13, 3
      %p119 = pnand %p117, %p118
      %p120 = pneg %p119
      // Predicated region
      $region21: #{tpu_custom_call.1} parent=5 // pred_check
        _
      $region22: #{tpu_custom_call.1} parent=5 // pred_check_branch
        %122 = sbr.rel (%p119) target = $region24
      $region23: #{tpu_custom_call.1} parent=5 // pred_region
        %s123 = ssub.s32 %s13, 1
        %s124 = sand.u32 %s40, 1
        %s125 = scalar_lea.sflag [#allocation3], %s124
        %s126 = sand.u32 %s40, 1
        %s127 = smul.addr %s126, 8
        %s128 = scalar_lea.vmem [#allocation2], %s127
        // Predicated region
        $region25: #{tpu_custom_call.1} parent=23 // pred_check
          %p129 = pneg %p53
        $region26: #{tpu_custom_call.1} parent=23 // pred_check_branch
          %131 = sbr.rel (%p129) target = $region28
        $region27: #{tpu_custom_call.1} parent=23 // pred_region
          %132 = dma.done %s125, 128
        $region28: #{tpu_custom_call.1} parent=23 // pred_fallthru
          _
        %s133 = sand.u32 %s40, 1
        %s134 = scalar_lea.sflag [#allocation3], %s133
        %s135 = sand.u32 %s40, 1
        %s136 = smul.addr %s135, 8
        %s137 = scalar_lea.vmem [#allocation2], %s136
        %p138 = pneg %p53
        %p139 = pneg %p50
        %p140 = pneg %p79
        %p141 = pneg %p76
        %s142 = sand.u32 %s66, 1
        %s143 = scalar_lea.sflag [#allocation4], %s142
        %s144 = sand.u32 %s66, 1
        %s145 = smul.addr %s144, 8
        %s146 = scalar_lea.vmem [#allocation5], %s145
        %p147 = scmp.eq.s32.totalorder %s23, 0
        // Predicated region
        $region29: #{tpu_custom_call.1} parent=23 // pred_check
          %p148 = pneg %p147
        $region30: #{tpu_custom_call.1} parent=23 // pred_check_branch
          %150 = sbr.rel (%p148) target = $region32
        $region31: #{tpu_custom_call.1} parent=23 // pred_region
          %151 = vst [vmem:[%s146] sm:$0xff] 0.0
        $region32: #{tpu_custom_call.1} parent=23 // pred_fallthru
          _
        %v152 = vld [vmem:[%s128] sm:$0xff]
        %v153 = vmul.f32 %v152, %v152
        %v154 = vrot.slane %v153, 4
        %v155 = vadd.f32 %v153, %v154
        %v156 = vrot.slane %v155, 2
        %v157 = vadd.f32 %v155, %v156
        %v158 = vrot.slane %v157, 1
        %v159 = vadd.f32 %v157, %v158
        %v160 = vld [vmem:[%s146] sm:$0x1]
        %v161 = vadd.f32 %v160, %v159
        %162 = vst [vmem:[%s146] sm:$0x1] %v161
        %s163 = sand.u32 %s66, 1
        %s164 = scalar_lea.sflag [#allocation4], %s163
        %s165 = sand.u32 %s66, 1
        %s166 = smul.addr %s165, 8
        %s167 = scalar_lea.vmem [#allocation5], %s166
        // Predicated region
        $region33: #{tpu_custom_call.1} parent=23 // pred_check
          %p168 = pneg %p76
        $region34: #{tpu_custom_call.1} parent=23 // pred_check_branch
          %170 = sbr.rel (%p168) target = $region36
        $region35: #{tpu_custom_call.1} parent=23 // pred_region
          %s172 = ssub.s32 128, 128
          %173 = vsyncadd %s164, %s172
          %s174 = smul.addr %s22, 128
          %s175 = scalar_lea.hbm %s1, %s174
          %s177 = sshll.u32 %s167, 4
          %s178 = int_to_ptr.vmem [resolvable:$true] %s177
          %180 = dma.vmem_to_hbm [thread:$0]  %s178, 128, %s175, %s164
        $region36: #{tpu_custom_call.1} parent=23 // pred_fallthru
          _
      $region24: #{tpu_custom_call.1} parent=5 // pred_fallthru
        _
      %p181 = scmp.le.s32.totalorder 2, %s13
      // Predicated region
      $region37: #{tpu_custom_call.1} parent=5 // pred_check
        %p182 = pneg %p181
      $region38: #{tpu_custom_call.1} parent=5 // pred_check_branch
        %184 = sbr.rel (%p182) target = $region40
      $region39: #{tpu_custom_call.1} parent=5 // pred_region
        %s185 = ssub.s32 %s13, 2
        // Predicated region
        $region41: #{tpu_custom_call.1} parent=39 // pred_check
          %p186 = pneg %p82
        $region42: #{tpu_custom_call.1} parent=39 // pred_check_branch
          %188 = sbr.rel (%p186) target = $region44
        $region43: #{tpu_custom_call.1} parent=39 // pred_region
          %s189 = sand.u32 %s67, 1
          %s190 = scalar_lea.sflag [#allocation4], %s189
          %s191 = sand.u32 %s67, 1
          %s192 = smul.addr %s191, 8
          %s193 = scalar_lea.vmem [#allocation5], %s192
          %194 = dma.done %s190, 128
        $region44: #{tpu_custom_call.1} parent=39 // pred_fallthru
          _
      $region40: #{tpu_custom_call.1} parent=5 // pred_fallthru
        _
    $region6: #{tpu_custom_call.1} parent=1 // loop_footer
      %s17 = sadd.s32 1, %s13
    $region7: #{tpu_custom_call.1} parent=1 // loop_footer_branch
      %12 = sbr.rel target = $region3
    $region8: #{tpu_custom_call.1} parent=1 // loop_exit
      _
    %195 = vsyncpa [#allocation3], 1
    %s196 = scalar_lea.sflag [#allocation3], 1
    %197 = vsyncpa %s196, 1
    %198 = vsyncpa [#allocation4], 1
    %s199 = scalar_lea.sflag [#allocation4], 1
    %200 = vsyncpa %s199, 1

</llo_original>
